<compile_context>
chip_gen: v6e
topology: v6e:2x2x1
jax: 0.10.0
libtpu: 0.0.40
codegen_flags: <defaults>
</compile_context>

<pallas_src>
import jax
import jax.numpy as jnp
from jax import lax
from jax.experimental import pallas as pl
from jax.experimental.pallas import tpu as pltpu

LN_EPS = 1e-5  # PyTorch nn.LayerNorm default

_TARGET_TILE_BYTES = 4 << 20   # ~4 MiB per activation tile per buffer
_MIN_GRID_STEPS = 8            # keep pipeline busy; >=2 steps for v7x megacore
_VMEM_LIMIT_BYTES = 48 << 20   # below v7x's 64 MiB physical VMEM


def _round_up(x, m):
    return -(-x // m) * m


def _choose_row_block(n_rows, h, itemsize):
    """Largest row block that (a) stays near the per-tile byte target and
    (b) leaves the grid with at least _MIN_GRID_STEPS steps when possible."""
    align = 16 if itemsize < 4 else 8
    bytes_per_row = max(h * itemsize, 1)

    # Byte-targeted cap (keeps double-buffered tiles small and VMEM-safe).
    rb_bytes = max(align, (_TARGET_TILE_BYTES // bytes_per_row) // align * align)

    # Step-count cap: aim for >= _MIN_GRID_STEPS grid steps so the pipeline
    # overlaps DMA-in / compute / DMA-out and the row grid splits across both
    # TensorCores on v7x.
    rb_steps = max(align, _round_up(-(-n_rows // _MIN_GRID_STEPS), align))

    rb = min(rb_bytes, rb_steps)
    rb = min(rb, _round_up(n_rows, align))  # never larger than the row count
    return int(max(align, rb))


def addnorm_kernel(x_ref, y_ref, gamma_ref, beta_ref, o_ref):
    # dropout(p) in eval mode is identity -> plain residual add.
    z = (y_ref[...] + x_ref[...]).astype(jnp.float32)
    mean = jnp.mean(z, axis=-1, keepdims=True)
    centered = z - mean
    var = jnp.mean(centered * centered, axis=-1, keepdims=True)
    inv = lax.rsqrt(var + LN_EPS)
    # gamma/beta are already f32 (1, H); broadcast over the row block.
    o_ref[...] = (centered * inv * gamma_ref[...] + beta_ref[...]).astype(o_ref.dtype)


def add_norm(x, y, gamma, beta, *, row_block=None):
    """x, y: (B, S, H); gamma, beta: (H,). Returns LayerNorm(y + x) over H."""
    B, S, H = x.shape
    N = B * S

    # Zero-copy reshapes (contiguous); no padding, no output slicing.
    x2 = x.reshape(N, H)
    y2 = y.reshape(N, H)
    g2 = gamma.astype(jnp.float32).reshape(1, H)
    b2 = beta.astype(jnp.float32).reshape(1, H)

    itemsize = jnp.dtype(x.dtype).itemsize
    if row_block is None:
        row_block = _choose_row_block(N, H, itemsize)

    grid = (pl.cdiv(N, row_block),)

    out = pl.pallas_call(
        addnorm_kernel,
        out_shape=jax.ShapeDtypeStruct((N, H), x.dtype),
        grid_spec=pltpu.PrefetchScalarGridSpec(
            num_scalar_prefetch=0,
            grid=grid,
            in_specs=[
                pl.BlockSpec((row_block, H), lambda i: (i, 0)),
                pl.BlockSpec((row_block, H), lambda i: (i, 0)),
                pl.BlockSpec((1, H), lambda i: (0, 0)),  # gamma: resident
                pl.BlockSpec((1, H), lambda i: (0, 0)),  # beta: resident
            ],
            out_specs=pl.BlockSpec((row_block, H), lambda i: (i, 0)),
        ),
        compiler_params=pltpu.CompilerParams(
            dimension_semantics=("parallel",),
            vmem_limit_bytes=_VMEM_LIMIT_BYTES,
        ),
    )(x2, y2, g2, b2)

    return out.reshape(B, S, H)


def add_norm_ref(x, y, gamma, beta):
    z = (y + x).astype(jnp.float32)
    mean = jnp.mean(z, axis=-1, keepdims=True)
    var = jnp.mean((z - mean) ** 2, axis=-1, keepdims=True)
    return ((z - mean) * lax.rsqrt(var + LN_EPS) * gamma + beta).astype(x.dtype)


if __name__ == "__main__":
    key = jax.random.PRNGKey(0)
    kx, ky, kg, kb = jax.random.split(key, 4)

    # Shapes implied by the module's example input X = torch.ones((2, 100, 24)):
    # (batch=2, seq=100, hidden=24). H=24 exercises the full-dim (non-128-
    # multiple) last-dim block and N=200 exercises the partial final row block.
    B, S, H = 2, 100, 24
    x = jax.random.normal(kx, (B, S, H), dtype=jnp.float32)
    y = jax.random.normal(ky, (B, S, H), dtype=jnp.float32)

    # PyTorch default LayerNorm init is gamma=1, beta=0; perturb slightly so the
    # affine part is actually exercised.
    gamma = 1.0 + 0.01 * jax.random.normal(kg, (H,), dtype=jnp.float32)
    beta = 0.01 * jax.random.normal(kb, (H,), dtype=jnp.float32)

    out = add_norm(x, y, gamma, beta)
    out = jax.block_until_ready(out)

    ref = add_norm_ref(x, y, gamma, beta)
    assert out.shape == (B, S, H)
    assert jnp.allclose(out, ref, atol=1e-5, rtol=1e-5)

    print("KERNEL_OK")
</pallas_src>

<mosaic_0001>
module attributes {stable_mosaic.version = 11 : i64} {
  func.func @addnorm_kernel(%arg0: i32, %arg1: memref<32x24xf32, #tpu.memory_space<vmem>>, %arg2: memref<32x24xf32, #tpu.memory_space<vmem>>, %arg3: memref<1x24xf32, #tpu.memory_space<vmem>>, %arg4: memref<1x24xf32, #tpu.memory_space<vmem>>, %arg5: memref<32x24xf32, #tpu.memory_space<vmem>>) attributes {dimension_semantics = [#tpu.dimension_semantics<parallel>], iteration_bounds = array<i64: 7>, scalar_prefetch = 0 : i64, scratch_operands = 0 : i64, tpu.core_type = #tpu.core_type<tc>, window_params = [{transform_indices = @transform_0, window_bounds = array<i64: 32, 24>}, {transform_indices = @transform_1, window_bounds = array<i64: 32, 24>}, {pipeline_mode = #tpu.pipeline_mode<synchronous>, transform_indices = @transform_2, window_bounds = array<i64: 1, 24>}, {pipeline_mode = #tpu.pipeline_mode<synchronous>, transform_indices = @transform_3, window_bounds = array<i64: 1, 24>}, {transform_indices = @transform_4, window_bounds = array<i64: 32, 24>}]} {
    %c0 = arith.constant 0 : index
    %c0_0 = arith.constant 0 : index
    %0 = vector.load %arg2[%c0, %c0_0] : memref<32x24xf32, #tpu.memory_space<vmem>>, vector<32x24xf32>
    %c0_1 = arith.constant 0 : index
    %c0_2 = arith.constant 0 : index
    %1 = vector.load %arg1[%c0_1, %c0_2] : memref<32x24xf32, #tpu.memory_space<vmem>>, vector<32x24xf32>
    %2 = arith.addf %0, %1 : vector<32x24xf32>
    %cst = arith.constant dense<0.000000e+00> : vector<32xf32>
    %3 = vector.multi_reduction <add>, %2, %cst [1] : vector<32x24xf32> to vector<32xf32>
    %4 = vector.shape_cast %3 : vector<32xf32> to vector<32x1xf32>
    %cst_3 = arith.constant 2.400000e+01 : f32
    %5 = vector.broadcast %cst_3 : f32 to vector<32x1xf32>
    %6 = arith.divf %4, %5 : vector<32x1xf32>
    %7 = vector.broadcast %6 : vector<32x1xf32> to vector<32x24xf32>
    %8 = arith.subf %2, %7 : vector<32x24xf32>
    %9 = arith.mulf %8, %8 : vector<32x24xf32>
    %cst_4 = arith.constant dense<0.000000e+00> : vector<32xf32>
    %10 = vector.multi_reduction <add>, %9, %cst_4 [1] : vector<32x24xf32> to vector<32xf32>
    %11 = vector.shape_cast %10 : vector<32xf32> to vector<32x1xf32>
    %cst_5 = arith.constant 2.400000e+01 : f32
    %12 = vector.broadcast %cst_5 : f32 to vector<32x1xf32>
    %13 = arith.divf %11, %12 : vector<32x1xf32>
    %cst_6 = arith.constant 9.99999974E-6 : f32
    %14 = vector.broadcast %cst_6 : f32 to vector<32x1xf32>
    %15 = arith.addf %13, %14 : vector<32x1xf32>
    %16 = math.rsqrt %15 : vector<32x1xf32>
    %17 = vector.broadcast %16 : vector<32x1xf32> to vector<32x24xf32>
    %18 = arith.mulf %8, %17 : vector<32x24xf32>
    %c0_7 = arith.constant 0 : index
    %c0_8 = arith.constant 0 : index
    %19 = vector.load %arg3[%c0_7, %c0_8] : memref<1x24xf32, #tpu.memory_space<vmem>>, vector<1x24xf32>
    %20 = vector.broadcast %19 : vector<1x24xf32> to vector<32x24xf32>
    %21 = arith.mulf %18, %20 : vector<32x24xf32>
    %c0_9 = arith.constant 0 : index
    %c0_10 = arith.constant 0 : index
    %22 = vector.load %arg4[%c0_9, %c0_10] : memref<1x24xf32, #tpu.memory_space<vmem>>, vector<1x24xf32>
    %23 = vector.broadcast %22 : vector<1x24xf32> to vector<32x24xf32>
    %24 = arith.addf %21, %23 : vector<32x24xf32>
    %c0_11 = arith.constant 0 : index
    %c0_12 = arith.constant 0 : index
    %25 = vector.load %arg5[%c0_11, %c0_12] : memref<32x24xf32, #tpu.memory_space<vmem>>, vector<32x24xf32>
    tpu.vector_store %arg5[%c0_11, %c0_12], %24 {strides = array<i32>} : memref<32x24xf32, #tpu.memory_space<vmem>>, vector<32x24xf32>,
    return
  }
  func.func @transform_0(%arg0: i32) -> (i32, i32) {
    %c0_i32 = arith.constant 0 : i32
    %c0_i32_0 = arith.constant 0 : i32
    return %arg0, %c0_i32 : i32, i32
  }
  func.func @transform_1(%arg0: i32) -> (i32, i32) {
    %c0_i32 = arith.constant 0 : i32
    %c0_i32_0 = arith.constant 0 : i32
    return %arg0, %c0_i32 : i32, i32
  }
  func.func @transform_2(%arg0: i32) -> (i32, i32) {
    %c0_i32 = arith.constant 0 : i32
    %c0_i32_0 = arith.constant 0 : i32
    %c0_i32_1 = arith.constant 0 : i32
    return %c0_i32, %c0_i32_0 : i32, i32
  }
  func.func @transform_3(%arg0: i32) -> (i32, i32) {
    %c0_i32 = arith.constant 0 : i32
    %c0_i32_0 = arith.constant 0 : i32
    %c0_i32_1 = arith.constant 0 : i32
    return %c0_i32, %c0_i32_0 : i32, i32
  }
  func.func @transform_4(%arg0: i32) -> (i32, i32) {
    %c0_i32 = arith.constant 0 : i32
    %c0_i32_0 = arith.constant 0 : i32
    return %arg0, %c0_i32 : i32, i32
  }
}

</mosaic_0001>

<llo_original>
// kernel: tpu_custom_call.1
$region0: #{tpu_custom_call.1}
  #allocation0 [shape = 'u32[]', space=smem, size = 0x4, offset = 0x4, fixed_abs, tag = 'smem constant byte address 0x4 - core index']
  #allocation1 [shape = 'u32[144,128]{1,0:T(1,128)}', space=vmem, size = 0x12000, scoped, tag = 'internal scratch']
  %s0 = inlined_call_operand.vmem [shape: f32[200,24], index: 0, kind: input, shape index: {}]
  %s1 = inlined_call_operand.vmem [shape: f32[200,24], index: 1, kind: input, shape index: {}]
  %s2 = inlined_call_operand.vmem [shape: f32[1,24], index: 2, kind: input, shape index: {}]
  %s3 = inlined_call_operand.vmem [shape: f32[1,24], index: 3, kind: input, shape index: {}]
  %s4 = inlined_call_operand.vmem [shape: f32[200,24], index: 4, kind: output, shape index: {}]
  %s5 = sld [smem:[#allocation0]]
  $region97: #{tpu_custom_call.1} parent=0
    _
  %s7 = ssub.s32 1, %s5
  %s8 = scalar_select 0, %s7, %s5
  $region1: #{tpu_custom_call.1} parent=0
    #allocation2 [shape = 'u8[32768]{0}', space=vmem, size = 0x8000, scoped, tag = 'output window, operand 0']
    loop: start=0, step=1, limit=9
    $region2: #{tpu_custom_call.1} parent=1 // loop_pre_header
      _
    $region3: #{tpu_custom_call.1} parent=1 // loop_header
      %s10 = sphi 0, %s14
      %p11 = scmp.ge.s32.totalorder %s10, 9
      %s20 = sphi 0, %s22
      %s23 = sphi 0, %s20
      %s24 = sphi 0, %s23
      %s40 = sphi 0, %s24
      %s46 = sphi 0, %s48
      %s49 = sphi 0, %s46
      %s50 = sphi 0, %s49
      %s66 = sphi 0, %s50
      %s70 = sphi 0, %s70
      %s72 = sphi 0, %s70
      %s73 = sphi 0, %s72
      %s87 = sphi 0, %s73
      %s91 = sphi 0, %s91
      %s93 = sphi 0, %s91
      %s94 = sphi 0, %s93
      %s108 = sphi 0, %s94
      %s114 = sphi 0, %s116
      %s117 = sphi 0, %s114
      %s118 = sphi 0, %s117
      %s134 = sphi 0, %s118
    $region4: #{tpu_custom_call.1} parent=1 // loop_header_branch
      %13 = sbr.rel (%p11) target = $region8
    $region5: #{tpu_custom_call.1} parent=1 // loop_body
      %s15 = ssub.s32 %s10, 1
      %s16 = ssub.s32 %s10, 2
      %s17 = sadd.s32 %s10, 1
      %s18 = ssub.s32 %s10, %s17
      %p19 = scmp.eq.s32.totalorder %s18, 0
      %s21 = sadd.s32 %s20, 1
      %s22 = scalar_select %p19, %s20, %s21
      %p25 = pneg %p19
      %p26 = scmp.eq.s32.totalorder %s10, 6
      %p27 = por %p25, %p26
      %p28 = scmp.ne.s32.totalorder %s20, %s23
      %p29 = scmp.eq.s32.totalorder %s10, 0
      %p30 = por %p28, %p29
      %p31 = scmp.ne.s32.totalorder %s20, %s23
      %p32 = scmp.eq.s32.totalorder %s15, 6
      %p33 = por %p31, %p32
      %p34 = scmp.ne.s32.totalorder %s23, %s24
      %p35 = scmp.eq.s32.totalorder %s15, 0
      %p36 = por %p34, %p35
      %p37 = scmp.ne.s32.totalorder %s23, %s24
      %p38 = scmp.eq.s32.totalorder %s16, 6
      %p39 = por %p37, %p38
      %p41 = scmp.ne.s32.totalorder %s24, %s40
      %p42 = scmp.eq.s32.totalorder %s16, 0
      %p43 = por %p41, %p42
      %s44 = ssub.s32 %s10, %s17
      %p45 = scmp.eq.s32.totalorder %s44, 0
      %s47 = sadd.s32 %s46, 1
      %s48 = scalar_select %p45, %s46, %s47
      %p51 = pneg %p45
      %p52 = scmp.eq.s32.totalorder %s10, 6
      %p53 = por %p51, %p52
      %p54 = scmp.ne.s32.totalorder %s46, %s49
      %p55 = scmp.eq.s32.totalorder %s10, 0
      %p56 = por %p54, %p55
      %p57 = scmp.ne.s32.totalorder %s46, %s49
      %p58 = scmp.eq.s32.totalorder %s15, 6
      %p59 = por %p57, %p58
      %p60 = scmp.ne.s32.totalorder %s49, %s50
      %p61 = scmp.eq.s32.totalorder %s15, 0
      %p62 = por %p60, %p61
      %p63 = scmp.ne.s32.totalorder %s49, %s50
      %p64 = scmp.eq.s32.totalorder %s16, 6
      %p65 = por %p63, %p64
      %p67 = scmp.ne.s32.totalorder %s50, %s66
      %p68 = scmp.eq.s32.totalorder %s16, 0
      %p69 = por %p67, %p68
      %s71 = sadd.s32 %s70, 1
      %p74 = scmp.eq.s32.totalorder %s10, 6
      %p75 = scmp.ne.s32.totalorder %s70, %s72
      %p76 = scmp.eq.s32.totalorder %s10, 0
      %p77 = por %p75, %p76
      %p78 = scmp.ne.s32.totalorder %s70, %s72
      %p79 = scmp.eq.s32.totalorder %s15, 6
      %p80 = por %p78, %p79
      %p81 = scmp.ne.s32.totalorder %s72, %s73
      %p82 = scmp.eq.s32.totalorder %s15, 0
      %p83 = por %p81, %p82
      %p84 = scmp.ne.s32.totalorder %s72, %s73
      %p85 = scmp.eq.s32.totalorder %s16, 6
      %p86 = por %p84, %p85
      %p88 = scmp.ne.s32.totalorder %s73, %s87
      %p89 = scmp.eq.s32.totalorder %s16, 0
      %p90 = por %p88, %p89
      %s92 = sadd.s32 %s91, 1
      %p95 = scmp.eq.s32.totalorder %s10, 6
      %p96 = scmp.ne.s32.totalorder %s91, %s93
      %p97 = scmp.eq.s32.totalorder %s10, 0
      %p98 = por %p96, %p97
      %p99 = scmp.ne.s32.totalorder %s91, %s93
      %p100 = scmp.eq.s32.totalorder %s15, 6
      %p101 = por %p99, %p100
      %p102 = scmp.ne.s32.totalorder %s93, %s94
      %p103 = scmp.eq.s32.totalorder %s15, 0
      %p104 = por %p102, %p103
      %p105 = scmp.ne.s32.totalorder %s93, %s94
      %p106 = scmp.eq.s32.totalorder %s16, 6
      %p107 = por %p105, %p106
      %p109 = scmp.ne.s32.totalorder %s94, %s108
      %p110 = scmp.eq.s32.totalorder %s16, 0
      %p111 = por %p109, %p110
      %s112 = ssub.s32 %s10, %s17
      %p113 = scmp.eq.s32.totalorder %s112, 0
      %s115 = sadd.s32 %s114, 1
      %s116 = scalar_select %p113, %s114, %s115
      %p119 = pneg %p113
      %p120 = scmp.eq.s32.totalorder %s10, 6
      %p121 = por %p119, %p120
      %p122 = scmp.ne.s32.totalorder %s114, %s117
      %p123 = scmp.eq.s32.totalorder %s10, 0
      %p124 = por %p122, %p123
      %p125 = scmp.ne.s32.totalorder %s114, %s117
      %p126 = scmp.eq.s32.totalorder %s15, 6
      %p127 = por %p125, %p126
      %p128 = scmp.ne.s32.totalorder %s117, %s118
      %p129 = scmp.eq.s32.totalorder %s15, 0
      %p130 = por %p128, %p129
      %p131 = scmp.ne.s32.totalorder %s117, %s118
      %p132 = scmp.eq.s32.totalorder %s16, 6
      %p133 = por %p131, %p132
      %p135 = scmp.ne.s32.totalorder %s118, %s134
      %p136 = scmp.eq.s32.totalorder %s16, 0
      %p137 = por %p135, %p136
      %p138 = scmp.le.s32.totalorder 1, %s10
      %p139 = scmp.lt.s32.totalorder %s10, 8
      %p140 = pnand %p138, %p139
      %p141 = pneg %p140
      // Predicated region
      $region9: #{tpu_custom_call.1} parent=5 // pred_check
        _
      $region10: #{tpu_custom_call.1} parent=5 // pred_check_branch
        %143 = sbr.rel (%p140) target = $region12
      $region11: #{tpu_custom_call.1} parent=5 // pred_region
        %s144 = ssub.s32 %s10, 1
        // Predicated region
        $region13: #{tpu_custom_call.1} parent=11 // pred_check
          %p145 = pneg %p83
        $region14: #{tpu_custom_call.1} parent=11 // pred_check_branch
          %147 = sbr.rel (%p145) target = $region16
        $region15: #{tpu_custom_call.1} parent=11 // pred_region
          _
        $region16: #{tpu_custom_call.1} parent=11 // pred_fallthru
          _
        // Predicated region
        $region17: #{tpu_custom_call.1} parent=11 // pred_check
          %p148 = pneg %p104
        $region18: #{tpu_custom_call.1} parent=11 // pred_check_branch
          %150 = sbr.rel (%p148) target = $region20
        $region19: #{tpu_custom_call.1} parent=11 // pred_region
          _
        $region20: #{tpu_custom_call.1} parent=11 // pred_fallthru
          _
      $region12: #{tpu_custom_call.1} parent=5 // pred_fallthru
        _
      %p151 = scmp.lt.s32.totalorder %s10, 7
      // Predicated region
      $region21: #{tpu_custom_call.1} parent=5 // pred_check
        %p152 = pneg %p151
      $region22: #{tpu_custom_call.1} parent=5 // pred_check_branch
        %154 = sbr.rel (%p152) target = $region24
      $region23: #{tpu_custom_call.1} parent=5 // pred_region
        // Predicated region
        $region25: #{tpu_custom_call.1} parent=23 // pred_check
          %p155 = pneg %p30
        $region26: #{tpu_custom_call.1} parent=23 // pred_check_branch
          %157 = sbr.rel (%p155) target = $region28
        $region27: #{tpu_custom_call.1} parent=23 // pred_region
          %s158 = smul.u32 4, %s10
          %s159 = ssub.s32 25, %s158
          %p160 = scmp.lt.s32.totalorder %s159, 4
          %s161 = scalar_select %p160, %s159, 4
          %s162 = smul.u32 128, %s161
          %p163 = scmp.lt.s32.totalorder %s158, 24
          %s164 = scalar_select %p163, %s158, 24
          %s165 = smul.addr %s164, 8
          %s166 = scalar_lea.vmem %s0, %s165
          %s167 = smul.u32 4, %s10
          %s168 = ssub.s32 25, %s167
          %p169 = scmp.lt.s32.totalorder %s168, 4
          %s170 = scalar_select %p169, %s168, 4
          %s171 = smul.u32 128, %s170
        $region28: #{tpu_custom_call.1} parent=23 // pred_fallthru
          _
        // Predicated region
        $region29: #{tpu_custom_call.1} parent=23 // pred_check
          %p172 = pneg %p56
        $region30: #{tpu_custom_call.1} parent=23 // pred_check_branch
          %174 = sbr.rel (%p172) target = $region32
        $region31: #{tpu_custom_call.1} parent=23 // pred_region
          %s175 = smul.u32 4, %s10
          %s176 = ssub.s32 25, %s175
          %p177 = scmp.lt.s32.totalorder %s176, 4
          %s178 = scalar_select %p177, %s176, 4
          %s179 = smul.u32 128, %s178
          %p180 = scmp.lt.s32.totalorder %s175, 24
          %s181 = scalar_select %p180, %s175, 24
          %s182 = smul.addr %s181, 8
          %s183 = scalar_lea.vmem %s1, %s182
          %s184 = smul.u32 4, %s10
          %s185 = ssub.s32 25, %s184
          %p186 = scmp.lt.s32.totalorder %s185, 4
          %s187 = scalar_select %p186, %s185, 4
          %s188 = smul.u32 128, %s187
        $region32: #{tpu_custom_call.1} parent=23 // pred_fallthru
          _
      $region24: #{tpu_custom_call.1} parent=5 // pred_fallthru
        _
      %p189 = scmp.le.s32.totalorder 1, %s10
      %p190 = scmp.lt.s32.totalorder %s10, 8
      %p191 = pnand %p189, %p190
      %p192 = pneg %p191
      // Predicated region
      $region33: #{tpu_custom_call.1} parent=5 // pred_check
        _
      $region34: #{tpu_custom_call.1} parent=5 // pred_check_branch
        %194 = sbr.rel (%p191) target = $region36
      $region35: #{tpu_custom_call.1} parent=5 // pred_region
        %s195 = ssub.s32 %s10, 1
        %s196 = smul.u32 4, %s15
        %s197 = ssub.s32 25, %s196
        %p198 = scmp.lt.s32.totalorder %s197, 4
        %s199 = scalar_select %p198, %s197, 4
        %s200 = smul.u32 128, %s199
        %p201 = scmp.lt.s32.totalorder %s196, 24
        %s202 = scalar_select %p201, %s196, 24
        %s203 = smul.addr %s202, 8
        %s204 = scalar_lea.vmem %s0, %s203
        %p205 = pneg %p36
        %p206 = pneg %p33
        %s207 = smul.u32 4, %s15
        %s208 = ssub.s32 25, %s207
        %p209 = scmp.lt.s32.totalorder %s208, 4
        %s210 = scalar_select %p209, %s208, 4
        %s211 = smul.u32 128, %s210
        %p212 = scmp.lt.s32.totalorder %s207, 24
        %s213 = scalar_select %p212, %s207, 24
        %s214 = smul.addr %s213, 8
        %s215 = scalar_lea.vmem %s1, %s214
        %p216 = pneg %p62
        %p217 = pneg %p59
        %p218 = pneg %p83
        %p219 = pneg %p80
        %p220 = pneg %p104
        %p221 = pneg %p101
        %p222 = pneg %p130
        %p223 = pneg %p127
        %s224 = sand.u32 %s117, 1
        %s225 = sand.u32 %s117, 1
        %s226 = smul.addr %s225, 32
        %s227 = scalar_lea.vmem [#allocation2], %s226
        %s228 = smul.u32 4, %s15
        %s229 = ssub.s32 25, %s228
        %p230 = scmp.lt.s32.totalorder %s229, 4
        %s231 = scalar_select %p230, %s229, 4
        %s232 = smul.u32 128, %s231
        %p233 = scmp.lt.s32.totalorder %s228, 24
        %s234 = scalar_select %p233, %s228, 24
        %s235 = smul.addr %s234, 8
        %s236 = scalar_lea.vmem %s0, %s235
        %s237 = smul.u32 4, %s15
        %s238 = ssub.s32 25, %s237
        %p239 = scmp.lt.s32.totalorder %s238, 4
        %s240 = scalar_select %p239, %s238, 4
        %s241 = smul.u32 128, %s240
        %s242 = smul.u32 4, %s15
        %s243 = ssub.s32 25, %s242
        %p244 = scmp.lt.s32.totalorder %s243, 4
        %s245 = scalar_select %p244, %s243, 4
        %s246 = smul.u32 128, %s245
        %p247 = scmp.lt.s32.totalorder %s242, 24
        %s248 = scalar_select %p247, %s242, 24
        %s249 = smul.addr %s248, 8
        %s250 = scalar_lea.vmem %s1, %s249
        %s251 = smul.u32 4, %s15
        %s252 = ssub.s32 25, %s251
        %p253 = scmp.lt.s32.totalorder %s252, 4
        %s254 = scalar_select %p253, %s252, 4
        %s255 = smul.u32 128, %s254
        %s256 = smul.u32 4, %s15
        %s257 = ssub.s32 25, %s256
        %p258 = scmp.lt.s32.totalorder %s257, 4
        %s259 = scalar_select %p258, %s257, 4
        %s260 = smul.u32 128, %s259
        %v261 = vld [vmem:[%s250] sm:$0xff]
        %v262 = vld [vmem:[%s250 + $0x8] sm:$0xff]
        %v263 = vld [vmem:[%s250 + $0x10] sm:$0xff]
        %v264 = vld [vmem:[%s250 + $0x18] sm:$0xff]
        %v265 = vld [vmem:[%s236] sm:$0xff]
        %v266 = vld [vmem:[%s236 + $0x8] sm:$0xff]
        %v267 = vld [vmem:[%s236 + $0x10] sm:$0xff]
        %v268 = vld [vmem:[%s236 + $0x18] sm:$0xff]
        %v269 = vadd.f32 %v261, %v265
        %v270 = vadd.f32 %v262, %v266
        %v271 = vadd.f32 %v263, %v267
        %v272 = vadd.f32 %v264, %v268
        %vm273 = vcmask 195584
        %v274 = vsel %vm273, %v269, 0.0
        %275 = vadd.xlane.f32.xlu0 %v274
        %v276 = vpop.xlane.xlu0 %275
        %v277 = vsel %vm273, %v270, 0.0
        %278 = vadd.xlane.f32.xlu0 %v277
        %v279 = vpop.xlane.xlu0 %278
        %v280 = vsel %vm273, %v271, 0.0
        %281 = vadd.xlane.f32.xlu0 %v280
        %v282 = vpop.xlane.xlu0 %281
        %v283 = vsel %vm273, %v272, 0.0
        %284 = vadd.xlane.f32.xlu0 %v283
        %v285 = vpop.xlane.xlu0 %284
        %v286 = vrcp.pop 24.0
        %v287 = vmul.f32 %v276, %v286
        %v288 = vmul.f32 %v279, %v286
        %v289 = vmul.f32 %v282, %v286
        %v290 = vmul.f32 %v285, %v286
        %v291 = vsub.f32 %v269, %v287
        %v292 = vsub.f32 %v270, %v288
        %v293 = vsub.f32 %v271, %v289
        %v294 = vsub.f32 %v272, %v290
        %v295 = vmul.f32 %v291, %v291
        %v296 = vmul.f32 %v292, %v292
        %v297 = vmul.f32 %v293, %v293
        %v298 = vmul.f32 %v294, %v294
        %v299 = vsel %vm273, %v295, 0.0
        %300 = vadd.xlane.f32.xlu0 %v299
        %v301 = vpop.xlane.xlu0 %300
        %v302 = vsel %vm273, %v296, 0.0
        %303 = vadd.xlane.f32.xlu0 %v302
        %v304 = vpop.xlane.xlu0 %303
        %v305 = vsel %vm273, %v297, 0.0
        %306 = vadd.xlane.f32.xlu0 %v305
        %v307 = vpop.xlane.xlu0 %306
        %v308 = vsel %vm273, %v298, 0.0
        %309 = vadd.xlane.f32.xlu0 %v308
        %v310 = vpop.xlane.xlu0 %309
        %v311 = vmul.f32 %v301, %v286
        %v312 = vmul.f32 %v304, %v286
        %v313 = vmul.f32 %v307, %v286
        %v314 = vmul.f32 %v310, %v286
        %v315 = vadd.f32 %v311, 1e-05
        %v316 = vadd.f32 %v312, 1e-05
        %v317 = vadd.f32 %v313, 1e-05
        %v318 = vadd.f32 %v314, 1e-05
        %v319 = vrsqrt.pop %v315
        %v320 = vrsqrt.pop %v316
        %v321 = vrsqrt.pop %v317
        %v322 = vrsqrt.pop %v318
        %v323 = vmul.f32 %v291, %v319
        %v324 = vmul.f32 %v292, %v320
        %v325 = vmul.f32 %v293, %v321
        %v326 = vmul.f32 %v294, %v322
        %v327 = vld [vmem:[%s2] sm:$0x1]
        %v329 = vlaneseq
        %v330 = vshrl.u32 %v329, 7
        %v331 = vsub.s32 0, %v330
        %v332 = vrot.slane %v327, %v331
        %v334 = vmul.f32 %v323, %v332
        %v335 = vmul.f32 %v324, %v332
        %v336 = vmul.f32 %v325, %v332
        %v337 = vmul.f32 %v326, %v332
        %v338 = vld [vmem:[%s3] sm:$0x1]
        %v340 = vlaneseq
        %v341 = vshrl.u32 %v340, 7
        %v342 = vsub.s32 0, %v341
        %v343 = vrot.slane %v338, %v342
        %v345 = vadd.f32 %v334, %v343
        %v346 = vadd.f32 %v335, %v343
        %v347 = vadd.f32 %v336, %v343
        %v348 = vadd.f32 %v337, %v343
        %349 = vst.msk [vmem:[%s227] sm:$0xff] %vm273, %v345
        %350 = vst.msk [vmem:[%s227 + $0x8] sm:$0xff] %vm273, %v346
        %351 = vst.msk [vmem:[%s227 + $0x10] sm:$0xff] %vm273, %v347
        %352 = vst.msk [vmem:[%s227 + $0x18] sm:$0xff] %vm273, %v348
        %s353 = sand.u32 %s117, 1
        %s354 = sand.u32 %s117, 1
        %s355 = smul.addr %s354, 32
        %s356 = scalar_lea.vmem [#allocation2], %s355
        // Predicated region
        $region37: #{tpu_custom_call.1} parent=35 // pred_check
          %p357 = pneg %p127
        $region38: #{tpu_custom_call.1} parent=35 // pred_check_branch
          %359 = sbr.rel (%p357) target = $region40
        $region39: #{tpu_custom_call.1} parent=35 // pred_region
          %s360 = smul.u32 4, %s15
          %s361 = ssub.s32 25, %s360
          %p362 = scmp.lt.s32.totalorder %s361, 4
          %s363 = scalar_select %p362, %s361, 4
          %s364 = smul.u32 128, %s363
          %p365 = scmp.ne.s32.totalorder 0, %s364
          %s366 = smul.addr %s360, 8
          %s367 = scalar_lea.vmem %s4, %s366
          // Predicated region
          $region41: #{tpu_custom_call.1} parent=39 // pred_check
            %p368 = pneg %p365
          $region42: #{tpu_custom_call.1} parent=39 // pred_check_branch
            %370 = sbr.rel (%p368) target = $region44
          $region43: #{tpu_custom_call.1} parent=39 // pred_region
            // Predicated region
            $region45: #{tpu_custom_call.1} parent=43 // pred_check
              _
            $region46: #{tpu_custom_call.1} parent=43 // pred_check_branch
              %372 = sbr.rel (0) target = $region48
            $region47: #{tpu_custom_call.1} parent=43 // pred_region
              // Predicated region
              $region67: #{tpu_custom_call.1} parent=47 // pred_check
                _
              $region68: #{tpu_custom_call.1} parent=47 // pred_check_branch
                %428 = sbr.rel (0) target = $region70
              $region69: #{tpu_custom_call.1} parent=47 // pred_region
                %s429 = sshrl.u32 %s363, 2
                // While loop
                $region71: #{tpu_custom_call.1} parent=69 // loop_pre_header
                  _
                $region72: #{tpu_custom_call.1} parent=69 // loop_header
                  %s431 = sphi 0, %s433
                  %p432 = scmp.ge.s32.totalorder %s431, %s429
                  %s436 = sphi 0, %s449
                  %s437 = sphi %s356, %s452
                  %s438 = sphi %s367, %s453
                $region73: #{tpu_custom_call.1} parent=69 // loop_header_branch
                  %435 = sbr.rel (%p432) target = $region77
                $region74: #{tpu_custom_call.1} parent=69 // loop_body
                  %v439 = vld [vmem:[%s437] sm:$0xff]
                  %440 = vst [vmem:[%s438] sm:$0xff] %v439
                  %v441 = vld [vmem:[%s437 + $0x8] sm:$0xff]
                  %442 = vst [vmem:[%s438 + $0x8] sm:$0xff] %v441
                  %v443 = vld [vmem:[%s437 + $0x10] sm:$0xff]
                  %444 = vst [vmem:[%s438 + $0x10] sm:$0xff] %v443
                  %v445 = vld [vmem:[%s437 + $0x18] sm:$0xff]
                  %446 = vst [vmem:[%s438 + $0x18] sm:$0xff] %v445
                  %s447 = sadd.s32 1, %s436
                  %p448 = scmp.ge.s32.totalorder %s447, %s429
                  %s449 = scalar_select %p448, 0, %s447
                  %s450 = smul.u32 %s449, 32
                  %s451 = smul.u32 %s449, 32
                  %s452 = scalar_lea.vmem %s356, %s450 [#allocation2]
                  %s453 = scalar_lea.vmem %s367, %s451
                $region75: #{tpu_custom_call.1} parent=69 // loop_footer
                  %s433 = sadd.s32 %s431, 1
                $region76: #{tpu_custom_call.1} parent=69 // loop_footer_branch
                  %430 = sbr.rel target = $region72
                $region77: #{tpu_custom_call.1} parent=69 // loop_exit
                  _
                %s454 = sshrl.u32 %s363, 2
                %s455 = sand.u32 %s363, 3
                %s456 = smul.u32 %s454, 4
                %s457 = smul.u32 8, %s456
                %s458 = scalar_lea.vmem %s356, %s457 [#allocation2]
                %s459 = smul.u32 8, %s456
                %s460 = scalar_lea.vmem %s367, %s459
                // While loop
                $region78: #{tpu_custom_call.1} parent=69 // loop_pre_header
                  _
                $region79: #{tpu_custom_call.1} parent=69 // loop_header
                  %s462 = sphi 0, %s464
                  %p463 = scmp.ge.s32.totalorder %s462, %s455
                  %s467 = sphi 0, %s474
                  %s468 = sphi %s458, %s477
                  %s469 = sphi %s460, %s478
                $region80: #{tpu_custom_call.1} parent=69 // loop_header_branch
                  %466 = sbr.rel (%p463) target = $region84
                $region81: #{tpu_custom_call.1} parent=69 // loop_body
                  %v470 = vld [vmem:[%s468] sm:$0xff]
                  %471 = vst [vmem:[%s469] sm:$0xff] %v470
                  %s472 = sadd.s32 1, %s467
                  %p473 = scmp.ge.s32.totalorder %s472, %s455
                  %s474 = scalar_select %p473, 0, %s472
                  %s475 = smul.u32 %s474, 8
                  %s476 = smul.u32 %s474, 8
                  %s477 = scalar_lea.vmem %s458, %s475 [#allocation2]
                  %s478 = scalar_lea.vmem %s460, %s476
                $region82: #{tpu_custom_call.1} parent=69 // loop_footer
                  %s464 = sadd.s32 %s462, 1
                $region83: #{tpu_custom_call.1} parent=69 // loop_footer_branch
                  %461 = sbr.rel target = $region79
                $region84: #{tpu_custom_call.1} parent=69 // loop_exit
                  _
              $region70: #{tpu_custom_call.1} parent=47 // pred_fallthru
                _
              // Predicated region
              $region85: #{tpu_custom_call.1} parent=47 // pred_check
                _
              $region86: #{tpu_custom_call.1} parent=47 // pred_check_branch
                %480 = sbr.rel target = $region88
              $region87: #{tpu_custom_call.1} parent=47 // pred_region
                _
              $region88: #{tpu_custom_call.1} parent=47 // pred_fallthru
                _
            $region48: #{tpu_custom_call.1} parent=43 // pred_fallthru
              _
            // Predicated region
            $region49: #{tpu_custom_call.1} parent=43 // pred_check
              _
            $region50: #{tpu_custom_call.1} parent=43 // pred_check_branch
              %374 = sbr.rel target = $region52
            $region51: #{tpu_custom_call.1} parent=43 // pred_region
              %s376 = ssub.s32 256, 1
              %s377 = sshrl.u32 %s363, 2
              // While loop
              $region53: #{tpu_custom_call.1} parent=51 // loop_pre_header
                _
              $region54: #{tpu_custom_call.1} parent=51 // loop_header
                %s379 = sphi 0, %s381
                %p380 = scmp.ge.s32.totalorder %s379, %s377
                %s384 = sphi 0, %s397
                %s385 = sphi %s356, %s400
                %s386 = sphi %s367, %s401
              $region55: #{tpu_custom_call.1} parent=51 // loop_header_branch
                %383 = sbr.rel (%p380) target = $region59
              $region56: #{tpu_custom_call.1} parent=51 // loop_body
                %v387 = vld [vmem:[%s385] sm:%s376]
                %388 = vst [vmem:[%s386] sm:%s376] %v387
                %v389 = vld [vmem:[%s385 + $0x8] sm:%s376]
                %390 = vst [vmem:[%s386 + $0x8] sm:%s376] %v389
                %v391 = vld [vmem:[%s385 + $0x10] sm:%s376]
                %392 = vst [vmem:[%s386 + $0x10] sm:%s376] %v391
                %v393 = vld [vmem:[%s385 + $0x18] sm:%s376]
                %394 = vst [vmem:[%s386 + $0x18] sm:%s376] %v393
                %s395 = sadd.s32 1, %s384
                %p396 = scmp.ge.s32.totalorder %s395, %s377
                %s397 = scalar_select %p396, 0, %s395
                %s398 = smul.u32 %s397, 32
                %s399 = smul.u32 %s397, 32
                %s400 = scalar_lea.vmem %s356, %s398 [#allocation2]
                %s401 = scalar_lea.vmem %s367, %s399
              $region57: #{tpu_custom_call.1} parent=51 // loop_footer
                %s381 = sadd.s32 %s379, 1
              $region58: #{tpu_custom_call.1} parent=51 // loop_footer_branch
                %378 = sbr.rel target = $region54
              $region59: #{tpu_custom_call.1} parent=51 // loop_exit
                _
              %s402 = sshrl.u32 %s363, 2
              %s403 = sand.u32 %s363, 3
              %s404 = smul.u32 %s402, 4
              %s405 = smul.u32 8, %s404
              %s406 = scalar_lea.vmem %s356, %s405 [#allocation2]
              %s407 = smul.u32 8, %s404
              %s408 = scalar_lea.vmem %s367, %s407
              // While loop
              $region60: #{tpu_custom_call.1} parent=51 // loop_pre_header
                _
              $region61: #{tpu_custom_call.1} parent=51 // loop_header
                %s410 = sphi 0, %s412
                %p411 = scmp.ge.s32.totalorder %s410, %s403
                %s415 = sphi 0, %s422
                %s416 = sphi %s406, %s425
                %s417 = sphi %s408, %s426
              $region62: #{tpu_custom_call.1} parent=51 // loop_header_branch
                %414 = sbr.rel (%p411) target = $region66
              $region63: #{tpu_custom_call.1} parent=51 // loop_body
                %v418 = vld [vmem:[%s416] sm:%s376]
                %419 = vst [vmem:[%s417] sm:%s376] %v418
                %s420 = sadd.s32 1, %s415
                %p421 = scmp.ge.s32.totalorder %s420, %s403
                %s422 = scalar_select %p421, 0, %s420
                %s423 = smul.u32 %s422, 8
                %s424 = smul.u32 %s422, 8
                %s425 = scalar_lea.vmem %s406, %s423 [#allocation2]
                %s426 = scalar_lea.vmem %s408, %s424
              $region64: #{tpu_custom_call.1} parent=51 // loop_footer
                %s412 = sadd.s32 %s410, 1
              $region65: #{tpu_custom_call.1} parent=51 // loop_footer_branch
                %409 = sbr.rel target = $region61
              $region66: #{tpu_custom_call.1} parent=51 // loop_exit
                _
            $region52: #{tpu_custom_call.1} parent=43 // pred_fallthru
              _
          $region44: #{tpu_custom_call.1} parent=39 // pred_fallthru
            _
          %481 = vnop
        $region40: #{tpu_custom_call.1} parent=35 // pred_fallthru
          _
      $region36: #{tpu_custom_call.1} parent=5 // pred_fallthru
        _
      %p482 = scmp.le.s32.totalorder 2, %s10
      // Predicated region
      $region89: #{tpu_custom_call.1} parent=5 // pred_check
        %p483 = pneg %p482
      $region90: #{tpu_custom_call.1} parent=5 // pred_check_branch
        %485 = sbr.rel (%p483) target = $region92
      $region91: #{tpu_custom_call.1} parent=5 // pred_region
        %s486 = ssub.s32 %s10, 2
        // Predicated region
        $region93: #{tpu_custom_call.1} parent=91 // pred_check
          %p487 = pneg %p133
        $region94: #{tpu_custom_call.1} parent=91 // pred_check_branch
          %489 = sbr.rel (%p487) target = $region96
        $region95: #{tpu_custom_call.1} parent=91 // pred_region
          %s490 = sand.u32 %s118, 1
          %s491 = sand.u32 %s118, 1
          %s492 = smul.addr %s491, 32
          %s493 = scalar_lea.vmem [#allocation2], %s492
        $region96: #{tpu_custom_call.1} parent=91 // pred_fallthru
          _
      $region92: #{tpu_custom_call.1} parent=5 // pred_fallthru
        _
    $region6: #{tpu_custom_call.1} parent=1 // loop_footer
      %s14 = sadd.s32 1, %s10
    $region7: #{tpu_custom_call.1} parent=1 // loop_footer_branch
      %9 = sbr.rel target = $region3
    $region8: #{tpu_custom_call.1} parent=1 // loop_exit
      _

</llo_original>
